<compile_context>
chip_gen: v7x
topology: tpu7x:2x2x1
jax: 0.10.0
libtpu: 0.0.40
codegen_flags: <defaults>
</compile_context>

<pallas_src>
import functools

import jax
import jax.numpy as jnp
from jax import lax
from jax.experimental import pallas as pl
from jax.experimental.pallas import tpu as pltpu

LN_EPS = 1e-5                      # PyTorch nn.LayerNorm default
_COMPUTE_DTYPE = jnp.bfloat16      # MXU operand dtype; accumulation stays f32


def _vmem_capacity_bytes():
    try:
        info = pltpu.get_tpu_info()
        cap = int(getattr(info, "vmem_capacity_bytes", 0) or 0)
        if cap > 0:
            return cap
    except Exception:
        pass
    return 64 * 1024 * 1024        # conservative: v7x physical VMEM per TensorCore


_VMEM_CAP = _vmem_capacity_bytes()
_VMEM_LIMIT = min((_VMEM_CAP * 3) // 4, 100 * 1024 * 1024)   # scoped VMEM limit per pallas_call
_BLOCK_BUDGET = max(_VMEM_LIMIT // 4, 1 << 20)               # budget used when sizing blocks


def _block(n, bytes_per_unit, budget, *, min_steps=2, align=8):
    """Largest divisor of n whose block fits `budget` bytes, leaving >= min_steps grid steps.

    Always returns a divisor of n (grids divide exactly), always honors the byte budget, and
    prefers multiples of `align` (sublane-friendly).  Never collapses to grid=(1,) when n allows
    min_steps, so megacore ('parallel') sharding has work for both TensorCores on v7x.
    """
    cap = max(1, budget // max(1, bytes_per_unit))
    if n >= min_steps:
        cap = min(cap, n // min_steps)
    cap = min(cap, n)
    divisors = [d for d in range(1, cap + 1) if n % d == 0]
    aligned = [d for d in divisors if d % align == 0]
    return (aligned or divisors)[-1]


# ---------------------------------------------------------------------------
# positional embedding add (one small pass)
# ---------------------------------------------------------------------------
def _add_pos_kernel(x_ref, pos_ref, o_ref):
    o_ref[...] = x_ref[...] + pos_ref[...][None, :, :]


def add_positional(x, pos):
    n_cls, S, D = x.shape
    per_class = 2 * 2 * 4 * S * D              # in + out, double-buffered
    cb = _block(n_cls, per_class, _BLOCK_BUDGET, min_steps=2, align=1)
    return pl.pallas_call(
        _add_pos_kernel,
        out_shape=jax.ShapeDtypeStruct((n_cls, S, D), x.dtype),
        grid=(n_cls // cb,),
        in_specs=[pl.BlockSpec((cb, S, D), lambda i: (i, 0, 0)),
                  pl.BlockSpec((S, D), lambda i: (0, 0))],
        out_specs=pl.BlockSpec((cb, S, D), lambda i: (i, 0, 0)),
        compiler_params=pltpu.CompilerParams(
            dimension_semantics=("parallel",),
            vmem_limit_bytes=_VMEM_LIMIT),
    )(x, pos)


# ---------------------------------------------------------------------------
# GEMM with fused LayerNorm prologue and bias / QuickGELU / residual epilogue
# ---------------------------------------------------------------------------
def _ln_linear_kernel(*refs, ln, has_bias, has_residual, activation, eps, compute_dtype):
    it = iter(refs)
    x_ref = next(it)
    g_ref = next(it) if ln else None
    b_ref = next(it) if ln else None
    w_ref = next(it)
    bias_ref = next(it) if has_bias else None
    res_ref = next(it) if has_residual else None
    o_ref = next(it)

    x = x_ref[...].astype(jnp.float32)
    if ln:
        mu = jnp.mean(x, axis=-1, keepdims=True)
        xc = x - mu
        var = jnp.mean(xc * xc, axis=-1, keepdims=True)
        x = xc * lax.rsqrt(var + eps) * g_ref[...].astype(jnp.float32) + b_ref[...].astype(jnp.float32)

    y = jnp.dot(x.astype(compute_dtype), w_ref[...].astype(compute_dtype),
                preferred_element_type=jnp.float32)
    if has_bias:
        y = y + bias_ref[...].astype(jnp.float32)
    if activation == "quick_gelu":          # CLIP text tower uses QuickGELU
        y = y * jax.nn.sigmoid(1.702 * y)
    if has_residual:
        y = y + res_ref[...].astype(jnp.float32)
    o_ref[...] = y.astype(o_ref.dtype)


def ln_linear(x2d, w, b=None, *, ln_g=None, ln_b=None, activation=None, residual=None):
    R, K = x2d.shape
    K2, N = w.shape
    assert K == K2
    has_ln = ln_g is not None

    per_row = 2 * 4 * (K + N + (N if residual is not None else 0))   # x + out (+res), 2x buffered
    resident = 2 * 4 * K * N + 4 * 4 * (K + N)                       # weight (2x) + small vectors
    row_budget = max(per_row, _BLOCK_BUDGET - resident)
    rb = _block(R, per_row, row_budget, min_steps=2, align=8)

    in_specs = [pl.BlockSpec((rb, K), lambda i: (i, 0))]
    args = [x2d]
    if has_ln:
        in_specs += [pl.BlockSpec((1, K), lambda i: (0, 0)),
                     pl.BlockSpec((1, K), lambda i: (0, 0))]
        args += [ln_g, ln_b]
    in_specs.append(pl.BlockSpec((K, N), lambda i: (0, 0)))
    args.append(w)
    if b is not None:
        in_specs.append(pl.BlockSpec((1, N), lambda i: (0, 0)))
        args.append(b)
    if residual is not None:
        in_specs.append(pl.BlockSpec((rb, N), lambda i: (i, 0)))
        args.append(residual)

    kernel = functools.partial(_ln_linear_kernel, ln=has_ln, has_bias=b is not None,
                               has_residual=residual is not None, activation=activation,
                               eps=LN_EPS, compute_dtype=_COMPUTE_DTYPE)
    return pl.pallas_call(
        kernel,
        out_shape=jax.ShapeDtypeStruct((R, N), x2d.dtype),
        grid=(R // rb,),
        in_specs=in_specs,
        out_specs=pl.BlockSpec((rb, N), lambda i: (i, 0)),
        compiler_params=pltpu.CompilerParams(
            dimension_semantics=("parallel",),
            vmem_limit_bytes=_VMEM_LIMIT),
    )(*args)


# ---------------------------------------------------------------------------
# causal multi-head attention, reading head-group slices straight from the QKV buffer
# ---------------------------------------------------------------------------
def _attention_kernel(q_ref, k_ref, v_ref, o_ref, *, n_cls_blk, seq, dh, scale, compute_dtype):
    hw = q_ref.shape[-1]
    hg = hw // dh
    q = q_ref[...].reshape(n_cls_blk, seq, hw)
    k = k_ref[...].reshape(n_cls_blk, seq, hw)
    v = v_ref[...].reshape(n_cls_blk, seq, hw)

    rows = lax.broadcasted_iota(jnp.int32, (seq, seq), 0)
    cols = lax.broadcasted_iota(jnp.int32, (seq, seq), 1)
    causal = (cols <= rows)[None, :, :]

    outs = []
    for j in range(hg):                         # small static loop over heads in this group
        sl = slice(j * dh, (j + 1) * dh)
        qj = q[:, :, sl].astype(compute_dtype)
        kj = k[:, :, sl].astype(compute_dtype)
        vj = v[:, :, sl].astype(compute_dtype)
        s = jnp.einsum('cqd,ckd->cqk', qj, kj, preferred_element_type=jnp.float32) * scale
        s = jnp.where(causal, s, -1e30)
        m = jnp.max(s, axis=-1, keepdims=True)
        p = jnp.exp(s - m)
        p = p / jnp.sum(p, axis=-1, keepdims=True)
        outs.append(jnp.einsum('cqk,ckd->cqd', p.astype(compute_dtype), vj,
                               preferred_element_type=jnp.float32))
    o = outs[0] if hg == 1 else jnp.concatenate(outs, axis=-1)       # (cb, S, hw)
    o_ref[...] = o.reshape(n_cls_blk * seq, hw).astype(o_ref.dtype)


def attention_from_qkv(qkv, *, n_cls, seq, n_heads):
    """qkv: (n_cls*seq, 3*D) packed [Q | K | V].  Returns merged attention output (n_cls*seq, D)."""
    R, threeD = qkv.shape
    D = threeD // 3
    dh = D // n_heads

    # heads per block so the last block dim is lane-dense (>=128) where possible
    divisors = [d for d in range(1, n_heads + 1) if n_heads % d == 0]
    cands = [d for d in divisors if d * dh >= 128]
    hg = min(cands) if cands else n_heads
    hw = hg * dh
    ng = n_heads // hg                                    # head-group grid extent

    per_class = 2 * 4 * seq * (3 * hw + hw) + 3 * 4 * hg * seq * seq   # qkv/out blocks + scores
    min_cls_steps = 1 if ng >= 2 else 2
    cb = _block(n_cls, per_class, _BLOCK_BUDGET, min_steps=min_cls_steps, align=1)

    kernel = functools.partial(_attention_kernel, n_cls_blk=cb, seq=seq, dh=dh,
                               scale=dh ** -0.5, compute_dtype=_COMPUTE_DTYPE)
    return pl.pallas_call(
        kernel,
        out_shape=jax.ShapeDtypeStruct((R, D), qkv.dtype),
        grid=(n_cls // cb, ng),
        in_specs=[pl.BlockSpec((cb * seq, hw), lambda c, g: (c, g)),            # Q cols
                  pl.BlockSpec((cb * seq, hw), lambda c, g: (c, ng + g)),       # K cols
                  pl.BlockSpec((cb * seq, hw), lambda c, g: (c, 2 * ng + g))],  # V cols
        out_specs=pl.BlockSpec((cb * seq, hw), lambda c, g: (c, g)),
        compiler_params=pltpu.CompilerParams(
            dimension_semantics=("parallel", "parallel"),
            vmem_limit_bytes=_VMEM_LIMIT),
    )(qkv, qkv, qkv)


# ---------------------------------------------------------------------------
# EOT-row gather (scalar prefetch) fused with ln_final and text_projection
# ---------------------------------------------------------------------------
def _eot_ln_project_kernel(eot_ref, x_ref, g_ref, b_ref, w_ref, o_ref, *, eps, compute_dtype):
    del eot_ref  # consumed by the index_maps
    x = x_ref[...].astype(jnp.float32)                  # (1, D) — the gathered EOT row
    mu = jnp.mean(x, axis=-1, keepdims=True)
    xc = x - mu
    var = jnp.mean(xc * xc, axis=-1, keepdims=True)
    h = xc * lax.rsqrt(var + eps) * g_ref[...].astype(jnp.float32) + b_ref[...].astype(jnp.float32)
    o_ref[...] = jnp.dot(h.astype(compute_dtype), w_ref[...].astype(compute_dtype),
                         preferred_element_type=jnp.float32).astype(o_ref.dtype)


def eot_ln_project(x2d, eot_rows, ln_g, ln_b, w_proj):
    R, D = x2d.shape
    D2, E = w_proj.shape
    assert D == D2
    n_cls = eot_rows.shape[0]
    kernel = functools.partial(_eot_ln_project_kernel, eps=LN_EPS, compute_dtype=_COMPUTE_DTYPE)
    return pl.pallas_call(
        kernel,
        out_shape=jax.ShapeDtypeStruct((n_cls, E), x2d.dtype),
        grid_spec=pltpu.PrefetchScalarGridSpec(
            num_scalar_prefetch=1,
            grid=(n_cls,),
            in_specs=[pl.BlockSpec((1, D), lambda i, eot: (eot[i], 0)),   # gather one row / step
                      pl.BlockSpec((1, D), lambda i, eot: (0, 0)),
                      pl.BlockSpec((1, D), lambda i, eot: (0, 0)),
                      pl.BlockSpec((D, E), lambda i, eot: (0, 0))],
            out_specs=pl.BlockSpec((1, E), lambda i, eot: (i, 0))),
        compiler_params=pltpu.CompilerParams(
            dimension_semantics=("arbitrary",),
            vmem_limit_bytes=_VMEM_LIMIT),
    )(eot_rows, x2d, ln_g, ln_b, w_proj)


# ---------------------------------------------------------------------------
# full TextEncoder forward
# ---------------------------------------------------------------------------
def text_encoder_forward(prompts, tokenized_prompts, params, *, n_heads):
    n_cls, S, D = prompts.shape

    x = add_positional(prompts, params["positional_embedding"])
    x2 = x.reshape(n_cls * S, D)                        # free metadata reshape

    for layer in params["layers"]:
        # ---- attention block: x = x + out_proj(attn(ln1(x))) ----
        qkv = ln_linear(x2, layer["attn_in_w"], layer["attn_in_b"],
                        ln_g=layer["ln1_g"], ln_b=layer["ln1_b"])              # (R, 3D)
        a = attention_from_qkv(qkv, n_cls=n_cls, seq=S, n_heads=n_heads)       # (R, D), merged heads
        x2 = ln_linear(a, layer["attn_out_w"], layer["attn_out_b"], residual=x2)

        # ---- MLP block: x = x + proj(quick_gelu(fc(ln2(x)))) ----
        h = ln_linear(x2, layer["mlp_fc_w"], layer["mlp_fc_b"],
                      ln_g=layer["ln2_g"], ln_b=layer["ln2_b"], activation="quick_gelu")
        x2 = ln_linear(h, layer["mlp_proj_w"], layer["mlp_proj_b"], residual=x2)

    # EOT index (argmax over token ids) is a tiny int op done in the wrapper; gather + ln_final +
    # text_projection are fused into a single scalar-prefetch kernel.
    eot_rows = (jnp.arange(n_cls, dtype=jnp.int32) * S
                + jnp.argmax(tokenized_prompts, axis=-1).astype(jnp.int32))
    return eot_ln_project(x2, eot_rows, params["ln_final_g"], params["ln_final_b"],
                          params["text_projection"])


# ---------------------------------------------------------------------------
# pure-JAX f32 reference (mirrors the PyTorch forward)
# ---------------------------------------------------------------------------
def text_encoder_reference(prompts, tokenized_prompts, params, *, n_heads):
    n_cls, S, D = prompts.shape
    dh = D // n_heads

    def ln(x, g, b):
        mu = x.mean(-1, keepdims=True)
        xc = x - mu
        var = (xc * xc).mean(-1, keepdims=True)
        return xc * lax.rsqrt(var + LN_EPS) * g + b

    causal = jnp.tril(jnp.ones((S, S), dtype=bool))
    x = prompts + params["positional_embedding"][None]
    for L in params["layers"]:
        h = ln(x, L["ln1_g"], L["ln1_b"])
        qkv = h @ L["attn_in_w"] + L["attn_in_b"]
        q, k, v = jnp.split(qkv, 3, axis=-1)

        def heads(t):
            return t.reshape(n_cls, S, n_heads, dh).transpose(0, 2, 1, 3)

        q, k, v = heads(q), heads(k), heads(v)
        s = jnp.einsum('bhqd,bhkd->bhqk', q, k) * (dh ** -0.5)
        s = jnp.where(causal[None, None], s, -1e30)
        p = jax.nn.softmax(s, axis=-1)
        a = jnp.einsum('bhqk,bhkd->bhqd', p, v).transpose(0, 2, 1, 3).reshape(n_cls, S, D)
        x = x + (a @ L["attn_out_w"] + L["attn_out_b"])
        h = ln(x, L["ln2_g"], L["ln2_b"])
        h = h @ L["mlp_fc_w"] + L["mlp_fc_b"]
        h = h * jax.nn.sigmoid(1.702 * h)
        x = x + (h @ L["mlp_proj_w"] + L["mlp_proj_b"])
    x = ln(x, params["ln_final_g"], params["ln_final_b"])
    eot = jnp.argmax(tokenized_prompts, axis=-1)
    pooled = x[jnp.arange(n_cls), eot]
    return pooled @ params["text_projection"]


if __name__ == "__main__":
    # Small shapes consistent with the module: n_cls prompts of length S, width D, H heads,
    # n_layers transformer blocks, projection to E dims. Parameters in float32 (self.dtype).
    n_cls, S, D, H, n_layers, E = 8, 16, 128, 4, 2, 128

    key = jax.random.PRNGKey(0)

    def nrm(k, shape, std):
        return (std * jax.random.normal(k, shape)).astype(jnp.float32)

    key, kp, kpos, ktp, kproj = jax.random.split(key, 5)
    prompts = nrm(kp, (n_cls, S, D), 0.1)
    pos_emb = nrm(kpos, (S, D), 0.01)
    text_projection = nrm(kproj, (D, E), 0.02)

    # Fake tokenized prompts: small token ids with a unique EOT (max id) per class.
    key, k1, k2 = jax.random.split(key, 3)
    tok = jax.random.randint(k1, (n_cls, S), 1, 1000, dtype=jnp.int32)
    eot_pos = jax.random.randint(k2, (n_cls,), 3, S, dtype=jnp.int32)
    tok = tok.at[jnp.arange(n_cls), eot_pos].set(49407)

    layers = []
    for _ in range(n_layers):
        key, *ks = jax.random.split(key, 11)
        layers.append(dict(
            ln1_g=(1.0 + nrm(ks[0], (1, D), 0.1)), ln1_b=nrm(ks[1], (1, D), 0.02),
            attn_in_w=nrm(ks[2], (D, 3 * D), 0.02), attn_in_b=nrm(ks[3], (1, 3 * D), 0.02),
            attn_out_w=nrm(ks[4], (D, D), 0.02), attn_out_b=nrm(ks[5], (1, D), 0.02),
            ln2_g=(1.0 + nrm(ks[6], (1, D), 0.1)), ln2_b=nrm(ks[7], (1, D), 0.02),
            mlp_fc_w=nrm(ks[8], (D, 4 * D), 0.02), mlp_fc_b=nrm(ks[9], (1, 4 * D), 0.02),
            mlp_proj_w=nrm(jax.random.fold_in(key, 1), (4 * D, D), 0.02),
            mlp_proj_b=nrm(jax.random.fold_in(key, 2), (1, D), 0.02),
        ))
    key, kg, kb = jax.random.split(key, 3)
    params = dict(
        positional_embedding=pos_emb,
        layers=layers,
        ln_final_g=(1.0 + nrm(kg, (1, D), 0.1)),
        ln_final_b=nrm(kb, (1, D), 0.02),
        text_projection=text_projection,
    )

    out = jax.block_until_ready(text_encoder_forward(prompts, tok, params, n_heads=H))
    ref = text_encoder_reference(prompts, tok, params, n_heads=H)

    assert out.shape == (n_cls, E)
    assert out.dtype == jnp.float32
    max_err = float(jnp.max(jnp.abs(out - ref)))
    # bf16 MXU operands / f32 accumulation vs. a pure-f32 reference: allow bf16-level tolerance
    # (typical observed error is a few 1e-3).
    assert max_err < 2e-2, f"mismatch vs reference: max abs err {max_err}"

    print("KERNEL_OK")
</pallas_src>

<mosaic_0001>
module attributes {stable_mosaic.version = 11 : i64} {
  func.func @_add_pos_kernel(%arg0: i32, %arg1: memref<4x16x128xf32, #tpu.memory_space<vmem>>, %arg2: memref<16x128xf32, #tpu.memory_space<vmem>>, %arg3: memref<4x16x128xf32, #tpu.memory_space<vmem>>) attributes {dimension_semantics = [#tpu.dimension_semantics<parallel>], iteration_bounds = array<i64: 2>, scalar_prefetch = 0 : i64, scratch_operands = 0 : i64, tpu.core_type = #tpu.core_type<tc>, window_params = [{transform_indices = @transform_0, window_bounds = array<i64: 4, 16, 128>}, {pipeline_mode = #tpu.pipeline_mode<synchronous>, transform_indices = @transform_1, window_bounds = array<i64: 16, 128>}, {transform_indices = @transform_2, window_bounds = array<i64: 4, 16, 128>}]} {
    %c0 = arith.constant 0 : index
    %c0_0 = arith.constant 0 : index
    %c0_1 = arith.constant 0 : index
    %0 = vector.load %arg1[%c0, %c0_0, %c0_1] : memref<4x16x128xf32, #tpu.memory_space<vmem>>, vector<4x16x128xf32>
    %c0_2 = arith.constant 0 : index
    %c0_3 = arith.constant 0 : index
    %1 = vector.load %arg2[%c0_2, %c0_3] : memref<16x128xf32, #tpu.memory_space<vmem>>, vector<16x128xf32>
    %2 = vector.shape_cast %1 : vector<16x128xf32> to vector<1x16x128xf32>
    %3 = vector.broadcast %2 : vector<1x16x128xf32> to vector<4x16x128xf32>
    %4 = arith.addf %0, %3 : vector<4x16x128xf32>
    %c0_4 = arith.constant 0 : index
    %c0_5 = arith.constant 0 : index
    %c0_6 = arith.constant 0 : index
    %5 = vector.load %arg3[%c0_4, %c0_5, %c0_6] : memref<4x16x128xf32, #tpu.memory_space<vmem>>, vector<4x16x128xf32>
    tpu.vector_store %arg3[%c0_4, %c0_5, %c0_6], %4 {strides = array<i32>} : memref<4x16x128xf32, #tpu.memory_space<vmem>>, vector<4x16x128xf32>,
    return
  }
  func.func @transform_0(%arg0: i32) -> (i32, i32, i32) {
    %c0_i32 = arith.constant 0 : i32
    %c0_i32_0 = arith.constant 0 : i32
    %c0_i32_1 = arith.constant 0 : i32
    return %arg0, %c0_i32, %c0_i32_0 : i32, i32, i32
  }
  func.func @transform_1(%arg0: i32) -> (i32, i32) {
    %c0_i32 = arith.constant 0 : i32
    %c0_i32_0 = arith.constant 0 : i32
    %c0_i32_1 = arith.constant 0 : i32
    return %c0_i32, %c0_i32_0 : i32, i32
  }
  func.func @transform_2(%arg0: i32) -> (i32, i32, i32) {
    %c0_i32 = arith.constant 0 : i32
    %c0_i32_0 = arith.constant 0 : i32
    %c0_i32_1 = arith.constant 0 : i32
    return %arg0, %c0_i32, %c0_i32_0 : i32, i32, i32
  }
}

</mosaic_0001>

<llo_original>
// kernel: tpu_custom_call.1
$region0: #{tpu_custom_call.1}
  #allocation0 [shape = 'u32[]', space=smem, size = 0x4, offset = 0x4, fixed_abs, tag = 'smem constant byte address 0x4 - core index']
  #allocation1 [shape = 'u32[144,128]{1,0:T(1,128)}', space=vmem, size = 0x12000, scoped, tag = 'internal scratch']
  %s0 = inlined_call_operand.hbm [shape: f32[8,16,128], index: 0, kind: input, shape index: {}]
  %s1 = inlined_call_operand.hbm [shape: f32[16,128], index: 1, kind: input, shape index: {}]
  %s2 = inlined_call_operand.hbm [shape: f32[8,16,128], index: 2, kind: output, shape index: {}]
  %s3 = sld [smem:[#allocation0]]
  $region49: #{tpu_custom_call.1} parent=0
    _
  %s5 = ssub.s32 1, %s3
  %s6 = scalar_select 0, %s5, %s3
  $region1: #{tpu_custom_call.1} parent=0
    #allocation2 [shape = 'u8[65536]{0}', space=vmem, size = 0x10000, scoped, tag = 'input window, operand 0']
    #allocation3 [shape = 's32[2]{0}', space=sflag, size = 0x8, scoped, tag = 'scoped memory for tpu_custom_call.1']
    #allocation4 [shape = 's32[2]{0}', space=sflag, size = 0x8, scoped, tag = 'scoped memory for tpu_custom_call.1']
    #allocation5 [shape = 'u8[8192]{0}', space=vmem, size = 0x2000, scoped, tag = 'input window, operand 1, single buffered']
    #allocation6 [shape = 's32[1]{0}', space=sflag, size = 0x4, scoped, tag = 'scoped memory for tpu_custom_call.1']
    #allocation7 [shape = 'u8[65536]{0}', space=vmem, size = 0x10000, scoped, tag = 'output window, operand 0']
    %7 = vsyncpa [#allocation3], 0
    %s8 = scalar_lea.sflag [#allocation3], 1
    %9 = vsyncpa %s8, 0
    %10 = vsyncpa [#allocation6], 0
    %11 = vsyncpa [#allocation4], 0
    %s12 = scalar_lea.sflag [#allocation4], 1
    %13 = vsyncpa %s12, 0
    loop: start=0, step=1, limit=4
    $region2: #{tpu_custom_call.1} parent=1 // loop_pre_header
      _
    $region3: #{tpu_custom_call.1} parent=1 // loop_header
      %s15 = sphi 0, %s19
      %p16 = scmp.ge.s32.totalorder %s15, 4
      %s25 = sphi 0, %s27
      %s28 = sphi 0, %s25
      %s29 = sphi 0, %s28
      %s45 = sphi 0, %s29
      %s49 = sphi 0, %s49
      %s51 = sphi 0, %s49
      %s52 = sphi 0, %s51
      %s66 = sphi 0, %s52
      %s72 = sphi 0, %s74
      %s75 = sphi 0, %s72
      %s76 = sphi 0, %s75
      %s92 = sphi 0, %s76
    $region4: #{tpu_custom_call.1} parent=1 // loop_header_branch
      %18 = sbr.rel (%p16) target = $region8
    $region5: #{tpu_custom_call.1} parent=1 // loop_body
      %s20 = ssub.s32 %s15, 1
      %s21 = ssub.s32 %s15, 2
      %s22 = sadd.s32 %s15, 1
      %s23 = ssub.s32 %s15, %s22
      %p24 = scmp.eq.s32.totalorder %s23, 0
      %s26 = sadd.s32 %s25, 1
      %s27 = scalar_select %p24, %s25, %s26
      %p30 = pneg %p24
      %p31 = scmp.eq.s32.totalorder %s15, 1
      %p32 = por %p30, %p31
      %p33 = scmp.ne.s32.totalorder %s25, %s28
      %p34 = scmp.eq.s32.totalorder %s15, 0
      %p35 = por %p33, %p34
      %p36 = scmp.ne.s32.totalorder %s25, %s28
      %p37 = scmp.eq.s32.totalorder %s20, 1
      %p38 = por %p36, %p37
      %p39 = scmp.ne.s32.totalorder %s28, %s29
      %p40 = scmp.eq.s32.totalorder %s20, 0
      %p41 = por %p39, %p40
      %p42 = scmp.ne.s32.totalorder %s28, %s29
      %p43 = scmp.eq.s32.totalorder %s21, 1
      %p44 = por %p42, %p43
      %p46 = scmp.ne.s32.totalorder %s29, %s45
      %p47 = scmp.eq.s32.totalorder %s21, 0
      %p48 = por %p46, %p47
      %s50 = sadd.s32 %s49, 1
      %p53 = scmp.eq.s32.totalorder %s15, 1
      %p54 = scmp.ne.s32.totalorder %s49, %s51
      %p55 = scmp.eq.s32.totalorder %s15, 0
      %p56 = por %p54, %p55
      %p57 = scmp.ne.s32.totalorder %s49, %s51
      %p58 = scmp.eq.s32.totalorder %s20, 1
      %p59 = por %p57, %p58
      %p60 = scmp.ne.s32.totalorder %s51, %s52
      %p61 = scmp.eq.s32.totalorder %s20, 0
      %p62 = por %p60, %p61
      %p63 = scmp.ne.s32.totalorder %s51, %s52
      %p64 = scmp.eq.s32.totalorder %s21, 1
      %p65 = por %p63, %p64
      %p67 = scmp.ne.s32.totalorder %s52, %s66
      %p68 = scmp.eq.s32.totalorder %s21, 0
      %p69 = por %p67, %p68
      %s70 = ssub.s32 %s15, %s22
      %p71 = scmp.eq.s32.totalorder %s70, 0
      %s73 = sadd.s32 %s72, 1
      %s74 = scalar_select %p71, %s72, %s73
      %p77 = pneg %p71
      %p78 = scmp.eq.s32.totalorder %s15, 1
      %p79 = por %p77, %p78
      %p80 = scmp.ne.s32.totalorder %s72, %s75
      %p81 = scmp.eq.s32.totalorder %s15, 0
      %p82 = por %p80, %p81
      %p83 = scmp.ne.s32.totalorder %s72, %s75
      %p84 = scmp.eq.s32.totalorder %s20, 1
      %p85 = por %p83, %p84
      %p86 = scmp.ne.s32.totalorder %s75, %s76
      %p87 = scmp.eq.s32.totalorder %s20, 0
      %p88 = por %p86, %p87
      %p89 = scmp.ne.s32.totalorder %s75, %s76
      %p90 = scmp.eq.s32.totalorder %s21, 1
      %p91 = por %p89, %p90
      %p93 = scmp.ne.s32.totalorder %s76, %s92
      %p94 = scmp.eq.s32.totalorder %s21, 0
      %p95 = por %p93, %p94
      %p96 = scmp.le.s32.totalorder 1, %s15
      %p97 = scmp.lt.s32.totalorder %s15, 3
      %p98 = pnand %p96, %p97
      %p99 = pneg %p98
      // Predicated region
      $region9: #{tpu_custom_call.1} parent=5 // pred_check
        _
      $region10: #{tpu_custom_call.1} parent=5 // pred_check_branch
        %101 = sbr.rel (%p98) target = $region12
      $region11: #{tpu_custom_call.1} parent=5 // pred_region
        %s102 = ssub.s32 %s15, 1
        // Predicated region
        $region13: #{tpu_custom_call.1} parent=11 // pred_check
          %p103 = pneg %p62
        $region14: #{tpu_custom_call.1} parent=11 // pred_check_branch
          %105 = sbr.rel (%p103) target = $region16
        $region15: #{tpu_custom_call.1} parent=11 // pred_region
          %s107 = ssub.s32 256, 256
          %108 = vsyncadd [#allocation6], %s107
          %s109 = sshll.u32 [#allocation5], 4
          %s110 = int_to_ptr.vmem [resolvable:$true] %s109
          %115 = dma.hbm_to_vmem [thread:$0]  %s1, 256, %s110, [#allocation6], 128, 128, 8
        $region16: #{tpu_custom_call.1} parent=11 // pred_fallthru
          _
      $region12: #{tpu_custom_call.1} parent=5 // pred_fallthru
        _
      %p116 = scmp.lt.s32.totalorder %s15, 2
      // Predicated region
      $region17: #{tpu_custom_call.1} parent=5 // pred_check
        %p117 = pneg %p116
      $region18: #{tpu_custom_call.1} parent=5 // pred_check_branch
        %119 = sbr.rel (%p117) target = $region20
      $region19: #{tpu_custom_call.1} parent=5 // pred_region
        // Predicated region
        $region21: #{tpu_custom_call.1} parent=19 // pred_check
          %p120 = pneg %p35
        $region22: #{tpu_custom_call.1} parent=19 // pred_check_branch
          %122 = sbr.rel (%p120) target = $region24
        $region23: #{tpu_custom_call.1} parent=19 // pred_region
          %s123 = sand.u32 %s25, 1
          %s124 = scalar_lea.sflag [#allocation3], %s123
          %s125 = sand.u32 %s25, 1
          %s126 = smul.addr %s125, 64
          %s127 = scalar_lea.vmem [#allocation2], %s126
          %s128 = smul.u32 4, %s15
          %s130 = ssub.s32 1024, 1024
          %131 = vsyncadd %s124, %s130
          %s132 = smul.addr %s128, 2
          %s133 = smul.addr %s132, 128
          %s134 = scalar_lea.hbm %s0, %s133
          %s135 = sshll.u32 %s127, 4
          %s136 = int_to_ptr.vmem [resolvable:$true] %s135
          %141 = dma.hbm_to_vmem [thread:$0]  %s134, 1024, %s136, %s124, 128, 128, 8
        $region24: #{tpu_custom_call.1} parent=19 // pred_fallthru
          _
      $region20: #{tpu_custom_call.1} parent=5 // pred_fallthru
        _
      %p142 = scmp.le.s32.totalorder 1, %s15
      %p143 = scmp.lt.s32.totalorder %s15, 3
      %p144 = pnand %p142, %p143
      %p145 = pneg %p144
      // Predicated region
      $region25: #{tpu_custom_call.1} parent=5 // pred_check
        _
      $region26: #{tpu_custom_call.1} parent=5 // pred_check_branch
        %147 = sbr.rel (%p144) target = $region28
      $region27: #{tpu_custom_call.1} parent=5 // pred_region
        %s148 = ssub.s32 %s15, 1
        %s149 = sand.u32 %s28, 1
        %s150 = scalar_lea.sflag [#allocation3], %s149
        %s151 = sand.u32 %s28, 1
        %s152 = smul.addr %s151, 64
        %s153 = scalar_lea.vmem [#allocation2], %s152
        // Predicated region
        $region29: #{tpu_custom_call.1} parent=27 // pred_check
          %p154 = pneg %p41
        $region30: #{tpu_custom_call.1} parent=27 // pred_check_branch
          %156 = sbr.rel (%p154) target = $region32
        $region31: #{tpu_custom_call.1} parent=27 // pred_region
          %157 = dma.done %s150, 1024
        $region32: #{tpu_custom_call.1} parent=27 // pred_fallthru
          _
        // Predicated region
        $region33: #{tpu_custom_call.1} parent=27 // pred_check
          %p158 = pneg %p62
        $region34: #{tpu_custom_call.1} parent=27 // pred_check_branch
          %160 = sbr.rel (%p158) target = $region36
        $region35: #{tpu_custom_call.1} parent=27 // pred_region
          %161 = dma.done [#allocation6], 256
        $region36: #{tpu_custom_call.1} parent=27 // pred_fallthru
          _
        %s162 = sand.u32 %s28, 1
        %s163 = scalar_lea.sflag [#allocation3], %s162
        %s164 = sand.u32 %s28, 1
        %s165 = smul.addr %s164, 64
        %s166 = scalar_lea.vmem [#allocation2], %s165
        %p167 = pneg %p41
        %p168 = pneg %p38
        %p169 = pneg %p62
        %p170 = pneg %p59
        %p171 = pneg %p88
        %p172 = pneg %p85
        %s173 = sand.u32 %s75, 1
        %s174 = scalar_lea.sflag [#allocation4], %s173
        %s175 = sand.u32 %s75, 1
        %s176 = smul.addr %s175, 64
        %s177 = scalar_lea.vmem [#allocation7], %s176
        %s178 = smul.u32 4, %s20
        %s179 = smul.u32 4, %s20
        %v180 = vld [vmem:[%s153] sm:$0xff]
        %v181 = vld [vmem:[%s153 + $0x8] sm:$0xff]
        %v182 = vld [vmem:[%s153 + $0x10] sm:$0xff]
        %v183 = vld [vmem:[%s153 + $0x18] sm:$0xff]
        %v184 = vld [vmem:[%s153 + $0x20] sm:$0xff]
        %v185 = vld [vmem:[%s153 + $0x28] sm:$0xff]
        %v186 = vld [vmem:[%s153 + $0x30] sm:$0xff]
        %v187 = vld [vmem:[%s153 + $0x38] sm:$0xff]
        %v188 = vld [vmem:[#allocation5] sm:$0xff]
        %v189 = vld [vmem:[#allocation5 + $0x8] sm:$0xff]
        %v190 = vadd.f32 %v180, %v188
        %v191 = vadd.f32 %v181, %v189
        %v192 = vadd.f32 %v182, %v188
        %v193 = vadd.f32 %v183, %v189
        %v194 = vadd.f32 %v184, %v188
        %v195 = vadd.f32 %v185, %v189
        %v196 = vadd.f32 %v186, %v188
        %v197 = vadd.f32 %v187, %v189
        %198 = vst [vmem:[%s177] sm:$0xff] %v190
        %199 = vst [vmem:[%s177 + $0x8] sm:$0xff] %v191
        %200 = vst [vmem:[%s177 + $0x10] sm:$0xff] %v192
        %201 = vst [vmem:[%s177 + $0x18] sm:$0xff] %v193
        %202 = vst [vmem:[%s177 + $0x20] sm:$0xff] %v194
        %203 = vst [vmem:[%s177 + $0x28] sm:$0xff] %v195
        %204 = vst [vmem:[%s177 + $0x30] sm:$0xff] %v196
        %205 = vst [vmem:[%s177 + $0x38] sm:$0xff] %v197
        %s206 = sand.u32 %s75, 1
        %s207 = scalar_lea.sflag [#allocation4], %s206
        %s208 = sand.u32 %s75, 1
        %s209 = smul.addr %s208, 64
        %s210 = scalar_lea.vmem [#allocation7], %s209
        // Predicated region
        $region37: #{tpu_custom_call.1} parent=27 // pred_check
          %p211 = pneg %p85
        $region38: #{tpu_custom_call.1} parent=27 // pred_check_branch
          %213 = sbr.rel (%p211) target = $region40
        $region39: #{tpu_custom_call.1} parent=27 // pred_region
          %s214 = smul.u32 4, %s20
          %s216 = ssub.s32 1024, 1024
          %217 = vsyncadd %s207, %s216
          %s218 = smul.addr %s214, 2
          %s219 = smul.addr %s218, 128
          %s220 = scalar_lea.hbm %s2, %s219
          %s221 = sshll.u32 %s210, 4
          %s222 = int_to_ptr.vmem [resolvable:$true] %s221
          %227 = dma.vmem_to_hbm [thread:$0]  %s222, 1024, %s220, %s207, 128, 128, 8
        $region40: #{tpu_custom_call.1} parent=27 // pred_fallthru
          _
      $region28: #{tpu_custom_call.1} parent=5 // pred_fallthru
        _
      %p228 = scmp.le.s32.totalorder 2, %s15
      // Predicated region
      $region41: #{tpu_custom_call.1} parent=5 // pred_check
        %p229 = pneg %p228
      $region42: #{tpu_custom_call.1} parent=5 // pred_check_branch
        %231 = sbr.rel (%p229) target = $region44
      $region43: #{tpu_custom_call.1} parent=5 // pred_region
        %s232 = ssub.s32 %s15, 2
        // Predicated region
        $region45: #{tpu_custom_call.1} parent=43 // pred_check
          %p233 = pneg %p91
        $region46: #{tpu_custom_call.1} parent=43 // pred_check_branch
          %235 = sbr.rel (%p233) target = $region48
        $region47: #{tpu_custom_call.1} parent=43 // pred_region
          %s236 = sand.u32 %s76, 1
          %s237 = scalar_lea.sflag [#allocation4], %s236
          %s238 = sand.u32 %s76, 1
          %s239 = smul.addr %s238, 64
          %s240 = scalar_lea.vmem [#allocation7], %s239
          %241 = dma.done %s237, 1024
        $region48: #{tpu_custom_call.1} parent=43 // pred_fallthru
          _
      $region44: #{tpu_custom_call.1} parent=5 // pred_fallthru
        _
    $region6: #{tpu_custom_call.1} parent=1 // loop_footer
      %s19 = sadd.s32 1, %s15
    $region7: #{tpu_custom_call.1} parent=1 // loop_footer_branch
      %14 = sbr.rel target = $region3
    $region8: #{tpu_custom_call.1} parent=1 // loop_exit
      _
    %242 = vsyncpa [#allocation3], 1
    %s243 = scalar_lea.sflag [#allocation3], 1
    %244 = vsyncpa %s243, 1
    %245 = vsyncpa [#allocation6], 1
    %246 = vsyncpa [#allocation4], 1
    %s247 = scalar_lea.sflag [#allocation4], 1
    %248 = vsyncpa %s247, 1

</llo_original>
